<compile_context>
chip_gen: v5e
topology: v5e:2x2
jax: 0.10.0
libtpu: 0.0.40
codegen_flags: <defaults>
</compile_context>

<pallas_src>
import numpy as np

import jax
import jax.numpy as jnp
from jax.experimental import pallas as pl
from jax.experimental.pallas import tpu as pltpu


# ----------------------------- Pallas kernel (hot path) -----------------------------

def _crop_pad_kernel(scal_ref, x_ref, keep_ref, o_ref):
    # scal_ref: SMEM int32[2] = (start, win_len)        (scalar prefetch)
    # x_ref:    (TR, TC) f32 tile of the flattened signal slab
    # keep_ref: (TR, 1)  int32 per-row "keep whole row" flag (the `ex` exception)
    # o_ref:    (TR, TC) f32 output tile
    start = scal_ref[0]
    win = scal_ref[1]
    j = pl.program_id(1)
    tc = x_ref.shape[1]

    col = j * tc + jax.lax.broadcasted_iota(jnp.int32, x_ref.shape, 1)
    in_window = (col >= start) & (col < start + win)          # (TR, TC)
    keep_row = keep_ref[...] > 0                              # (TR, 1) -> broadcast
    o_ref[...] = jnp.where(in_window | keep_row, x_ref[...], jnp.float32(0.0))


def _round_up(v, m):
    return (v + m - 1) // m * m


def _apply_crop_pad(x, start, win_len, ex=None):
    """Masked copy: keep x[..., start:start+win_len], zero the rest; rows in `ex`
    (indexing axis -2) are kept whole.  Runs on TPU via a tiled Pallas kernel."""
    x = jnp.asarray(x, jnp.float32)           # matches torch.Tensor(o) -> float32
    orig_shape = x.shape
    L = orig_shape[-1]
    R = int(np.prod(orig_shape[:-1])) if x.ndim > 1 else 1
    x2 = x.reshape(R, L)

    # per-row keep flag derived from `ex` (channel axis is -2)
    keep = np.zeros((R,), np.int32)
    if ex is not None and x.ndim >= 2:
        C = orig_shape[-2]
        ch_keep = np.zeros((C,), np.int32)
        ch_keep[np.atleast_1d(np.asarray(ex, dtype=np.int64))] = 1
        keep = np.tile(ch_keep, R // C)

    # ---- tiling: lane-dense column tiles, sublane-aligned row tiles ----
    R_pad = _round_up(max(R, 8), 8)
    TR = min(R_pad, 256)
    R_pad = _round_up(R_pad, TR)
    L_pad = _round_up(max(L, 128), 128)
    TC = min(L_pad, 1024)
    L_pad = _round_up(L_pad, TC)

    xp = jnp.pad(x2, ((0, R_pad - R), (0, L_pad - L)))
    keep_p = jnp.asarray(np.pad(keep, (0, R_pad - R)).reshape(R_pad, 1))
    scal = jnp.asarray([start, win_len], jnp.int32)

    grid = (R_pad // TR, L_pad // TC)
    yp = pl.pallas_call(
        _crop_pad_kernel,
        out_shape=jax.ShapeDtypeStruct((R_pad, L_pad), jnp.float32),
        grid_spec=pltpu.PrefetchScalarGridSpec(
            num_scalar_prefetch=1,
            grid=grid,
            in_specs=[
                pl.BlockSpec((TR, TC), lambda i, j, s: (i, j)),
                pl.BlockSpec((TR, 1), lambda i, j, s: (i, 0)),
            ],
            out_specs=pl.BlockSpec((TR, TC), lambda i, j, s: (i, j)),
        ),
        compiler_params=pltpu.CompilerParams(
            dimension_semantics=("parallel", "parallel")),
    )(scal, xp, keep_p)

    return yp[:R, :L].reshape(orig_shape)


# ----------------------------- module wrapper (host-side random glue) -----------------------------

def ts_random_crop_pad(o, magnitude=0.05, ex=None, rng=None):
    """JAX/Pallas equivalent of TSRandomCropPad(magnitude, ex).forward(o)."""
    if rng is None:
        rng = np.random
    o = jnp.asarray(o, jnp.float32)           # torch.Tensor(o)
    if not magnitude or magnitude <= 0:
        return o
    seq_len = o.shape[-1]
    lambd = float(rng.beta(magnitude, magnitude))
    lambd = max(lambd, 1.0 - lambd)
    win_len = int(round(seq_len * lambd))
    if win_len == seq_len:
        return o
    if hasattr(rng, "integers"):
        start = int(rng.integers(0, seq_len - win_len))
    else:
        start = int(rng.randint(0, seq_len - win_len))
    return _apply_crop_pad(o, start, win_len, ex)


# ----------------------------- numpy reference (independent path) -----------------------------

def _reference(xnp, start, win_len, ex=None):
    out = np.zeros_like(xnp)
    out[..., start:start + win_len] = xnp[..., start:start + win_len]
    if ex is not None:
        out[..., ex, :] = xnp[..., ex, :]
    return out


# ----------------------------- main -----------------------------

if __name__ == "__main__":
    key = jax.random.PRNGKey(0)
    B, C, L = 2, 4, 16
    X = jax.random.normal(key, (B, C, L), dtype=jnp.float32)
    Xnp = np.asarray(X, dtype=np.float32)

    # 1) direct kernel test (fixed window, no exception channels)
    start, win_len = 3, 9
    y1 = jax.block_until_ready(_apply_crop_pad(X, start, win_len, ex=None))
    np.testing.assert_allclose(np.asarray(y1), _reference(Xnp, start, win_len, None),
                               rtol=0, atol=0)

    # 2) direct kernel test with `ex` channels kept intact
    y2 = jax.block_until_ready(_apply_crop_pad(X, start, win_len, ex=[1, 3]))
    np.testing.assert_allclose(np.asarray(y2), _reference(Xnp, start, win_len, [1, 3]),
                               rtol=0, atol=0)

    # 3) full module path (deterministic host-side beta/randint glue)
    rng = np.random.default_rng(0)
    y3 = jax.block_until_ready(ts_random_crop_pad(X, magnitude=1.0, ex=None, rng=rng))
    rng_ref = np.random.default_rng(0)
    lambd = float(rng_ref.beta(1.0, 1.0))
    lambd = max(lambd, 1.0 - lambd)
    win = int(round(L * lambd))
    if win == L:
        ref3 = Xnp
    else:
        st = int(rng_ref.integers(0, L - win))
        ref3 = _reference(Xnp, st, win, None)
    np.testing.assert_allclose(np.asarray(y3), ref3, rtol=0, atol=0)

    print("KERNEL_OK")
</pallas_src>

<mosaic_0001>
module attributes {stable_mosaic.version = 11 : i64} {
  func.func @_crop_pad_kernel(%arg0: i32, %arg1: i32, %arg2: memref<2xi32, #tpu.memory_space<smem>>, %arg3: memref<8x128xf32, #tpu.memory_space<vmem>>, %arg4: memref<8x1xi32, #tpu.memory_space<vmem>>, %arg5: memref<8x128xf32, #tpu.memory_space<vmem>>) attributes {dimension_semantics = [#tpu.dimension_semantics<parallel>, #tpu.dimension_semantics<parallel>], iteration_bounds = array<i64: 1, 1>, scalar_prefetch = 1 : i64, scratch_operands = 0 : i64, tpu.core_type = #tpu.core_type<tc>, window_params = [{transform_indices = @transform_0, window_bounds = array<i64: 8, 128>}, {transform_indices = @transform_1, window_bounds = array<i64: 8, 1>}, {transform_indices = @transform_2, window_bounds = array<i64: 8, 128>}]} {
    %c0 = arith.constant 0 : index
    %0 = memref.load %arg2[%c0] : memref<2xi32, #tpu.memory_space<smem>>
    %c1 = arith.constant 1 : index
    %1 = memref.load %arg2[%c1] : memref<2xi32, #tpu.memory_space<smem>>
    %c128_i32 = arith.constant 128 : i32
    %2 = arith.muli %arg1, %c128_i32 : i32
    %3 = tpu.iota {dimensions = array<i32: 1>} : vector<8x128xi32>
    %4 = vector.broadcast %2 : i32 to vector<8x128xi32>
    %5 = arith.addi %4, %3 : vector<8x128xi32>
    %6 = vector.broadcast %0 : i32 to vector<8x128xi32>
    %7 = arith.cmpi sge, %5, %6 : vector<8x128xi32>
    %8 = arith.addi %0, %1 : i32
    %9 = vector.broadcast %8 : i32 to vector<8x128xi32>
    %10 = arith.cmpi slt, %5, %9 : vector<8x128xi32>
    %11 = arith.andi %7, %10 : vector<8x128xi1>
    %c0_0 = arith.constant 0 : index
    %c0_1 = arith.constant 0 : index
    %12 = vector.load %arg4[%c0_0, %c0_1] : memref<8x1xi32, #tpu.memory_space<vmem>>, vector<8x1xi32>
    %c0_i32 = arith.constant 0 : i32
    %13 = vector.broadcast %c0_i32 : i32 to vector<8x1xi32>
    %14 = arith.cmpi sgt, %12, %13 : vector<8x1xi32>
    %15 = vector.broadcast %14 : vector<8x1xi1> to vector<8x128xi1>
    %16 = arith.ori %11, %15 : vector<8x128xi1>
    %c0_2 = arith.constant 0 : index
    %c0_3 = arith.constant 0 : index
    %17 = vector.load %arg3[%c0_2, %c0_3] : memref<8x128xf32, #tpu.memory_space<vmem>>, vector<8x128xf32>
    %cst = arith.constant 0.000000e+00 : f32
    %18 = vector.broadcast %cst : f32 to vector<8x128xf32>
    %19 = arith.select %16, %17, %18 : vector<8x128xi1>, vector<8x128xf32>
    %c0_4 = arith.constant 0 : index
    %c0_5 = arith.constant 0 : index
    %20 = vector.load %arg5[%c0_4, %c0_5] : memref<8x128xf32, #tpu.memory_space<vmem>>, vector<8x128xf32>
    tpu.vector_store %arg5[%c0_4, %c0_5], %19 {strides = array<i32>} : memref<8x128xf32, #tpu.memory_space<vmem>>, vector<8x128xf32>,
    return
  }
  func.func @transform_0(%arg0: i32, %arg1: i32, %arg2: memref<2xi32, #tpu.memory_space<smem>>) -> (i32, i32) {
    %c0_i32 = arith.constant 0 : i32
    return %arg0, %arg1 : i32, i32
  }
  func.func @transform_1(%arg0: i32, %arg1: i32, %arg2: memref<2xi32, #tpu.memory_space<smem>>) -> (i32, i32) {
    %c0_i32 = arith.constant 0 : i32
    %c0_i32_0 = arith.constant 0 : i32
    return %arg0, %c0_i32 : i32, i32
  }
  func.func @transform_2(%arg0: i32, %arg1: i32, %arg2: memref<2xi32, #tpu.memory_space<smem>>) -> (i32, i32) {
    %c0_i32 = arith.constant 0 : i32
    return %arg0, %arg1 : i32, i32
  }
}

</mosaic_0001>

<llo_original>
// kernel: tpu_custom_call.1
$region0: #{tpu_custom_call.1}
  #allocation0 [shape = 'u32[]', space=smem, size = 0x4, offset = 0x4, fixed_abs, tag = 'smem constant byte address 0x4 - core index']
  #allocation1 [shape = 'u32[72,128]{1,0:T(1,128)}', space=vmem, size = 0x9000, scoped, tag = 'internal scratch']
  #allocation2 [shape = 's32[1]{0}', space=sflag, size = 0x4, scoped, tag = 'scoped memory for tpu_custom_call.1']
  #allocation3 [shape = 'u8[512]{0}', space=smem, size = 0x200, scoped, tag = 'prefetched SMEM operand 0']
  %s0 = inlined_call_operand.vmem [shape: s32[2], index: 0, kind: input, shape index: {}]
  %s1 = inlined_call_operand.vmem [shape: f32[8,128], index: 1, kind: input, shape index: {}]
  %s2 = inlined_call_operand.vmem [shape: s32[8,1], index: 2, kind: input, shape index: {}]
  %s3 = inlined_call_operand.hbm [shape: f32[8,128], index: 3, kind: output, shape index: {}]
  %s4 = sld [smem:[#allocation0]]
  $region18: #{tpu_custom_call.1} parent=0
    _
  %s6 = ssub.s32 1, %s4
  %s7 = scalar_select 0, %s6, %s4
  %s9 = sshll.u32 %s0, 4
  %s10 = int_to_ptr.vmem [resolvable:$true] %s9
  %12 = dma.vmem_to_smem %s10, 16, [#allocation3], [#allocation2]
  %14 = dma.done [#allocation2], 16
  %15 = sfence
  $region1: #{tpu_custom_call.1} parent=0
    #allocation4 [shape = 'u8[4096]{0}', space=vmem, size = 0x1000, scoped, tag = 'output window, operand 0, single buffered']
    #allocation5 [shape = 's32[1]{0}', space=sflag, size = 0x4, scoped, tag = 'scoped memory for tpu_custom_call.1']
    %16 = vsyncpa [#allocation5], 0
    // Predicated region
    $region2: #{tpu_custom_call.1} parent=1 // pred_check
      _
    $region3: #{tpu_custom_call.1} parent=1 // pred_check_branch
      %18 = sbr.rel (0) target = $region5
    $region4: #{tpu_custom_call.1} parent=1 // pred_region
      _
    $region5: #{tpu_custom_call.1} parent=1 // pred_fallthru
      _
    // Predicated region
    $region6: #{tpu_custom_call.1} parent=1 // pred_check
      _
    $region7: #{tpu_custom_call.1} parent=1 // pred_check_branch
      %20 = sbr.rel (0) target = $region9
    $region8: #{tpu_custom_call.1} parent=1 // pred_region
      _
    $region9: #{tpu_custom_call.1} parent=1 // pred_fallthru
      _
    %s21 = sld [smem:[#allocation3]]
    %s22 = sld [smem:[#allocation3 + $0x1]]
    %s23 = smul.u32 0, 128
    %v24 = vlaneseq
    %v25 = vand.u32 %v24, 127
    %v26 = vstv %s23
    %v27 = vadd.s32 %v26, %v25
    %v28 = vstv %s21
    %vm29 = vcmp.ge.s32.totalorder %v27, %v28
    %s30 = sadd.s32 %s21, %s22
    %v31 = vstv %s30
    %vm32 = vcmp.lt.s32.totalorder %v27, %v31
    %vm33 = vmand %vm29, %vm32
    %v34 = vld [vmem:[%s2] sm:$0xff]
    %vm35 = vcmp.gt.s32.totalorder %v34, 0
    %v36 = vsel %vm35, 1, 0
    %37 = vset.pattern.permute.xlu0 0
    %38 = vperm.xlu0 %37, %v36
    %v39 = vpop.permute.xlu0 %38
    %vm40 = vcmp.eq.s32.totalorder %v39, 1
    %vm41 = vmor %vm33, %vm40
    %v42 = vld [vmem:[%s1] sm:$0xff]
    %v43 = vsel %vm41, %v42, 0.0
    %44 = vst [vmem:[#allocation4] sm:$0xff] %v43
    // Predicated region
    $region10: #{tpu_custom_call.1} parent=1 // pred_check
      _
    $region11: #{tpu_custom_call.1} parent=1 // pred_check_branch
      %46 = sbr.rel (0) target = $region13
    $region12: #{tpu_custom_call.1} parent=1 // pred_region
      %48 = vsyncadd [#allocation5], 0
      %s50 = sshll.u32 [#allocation4], 4
      %s51 = int_to_ptr.vmem [resolvable:$true] %s50
      %s52 = sshll.u32 %s3, 4
      %s53 = int_to_ptr.hbm [resolvable:$true] %s52
      %55 = dma.vmem_to_hbm [thread:$0]  %s51, 128, %s53, [#allocation5]
    $region13: #{tpu_custom_call.1} parent=1 // pred_fallthru
      _
    // Predicated region
    $region14: #{tpu_custom_call.1} parent=1 // pred_check
      _
    $region15: #{tpu_custom_call.1} parent=1 // pred_check_branch
      %57 = sbr.rel (0) target = $region17
    $region16: #{tpu_custom_call.1} parent=1 // pred_region
      %59 = dma.done [#allocation5], 128
    $region17: #{tpu_custom_call.1} parent=1 // pred_fallthru
      _
    %60 = vsyncpa [#allocation5], 1

</llo_original>
